<compile_context>
chip_gen: v6e
topology: v6e:2x2x1
jax: 0.10.0
libtpu: 0.0.40
codegen_flags: <defaults>
</compile_context>

<pallas_src>
import jax
import jax.numpy as jnp
import numpy as np
from jax.experimental import pallas as pl
from jax.experimental.pallas import tpu as pltpu


_UNROLL_C_MAX = 8   # fully unroll the channel loop up to this many channels


# ------------------------------ Pallas kernel ------------------------------ #

def _convkb_kernel(convw_ref, cbias_ref, linb_ref, linw_ref,
                   h_ref, r_ref, t_ref, labels_ref,
                   score_ref, logit_ref):
    # bf16 over the DMA, f32 for all VPU/EUP math (portable v5e/v6e/v7x).
    # TODO(synk): on v6e/v7x keep the taps / tanh in bf16 (bf16 VALU/EUP) and
    # only accumulate in f32; v5e has no bf16 VPU so f32 is the portable path.
    embs = (h_ref[...].astype(jnp.float32),
            r_ref[...].astype(jnp.float32),
            t_ref[...].astype(jnp.float32))             # each (tb, D), D on lanes
    tb, D = embs[0].shape
    C, P = linw_ref.shape
    k = D - P + 1

    # Hoist the 3k shifted windows out of the channel loop: each non-aligned
    # lane slice costs an XLU relayout copy, so emit it once, not C times.
    # wins[i*3 + j] == embs[j][:, i:i+P]  (matches the conv-weight flat index).
    wins = [embs[j][:, i:i + P] for i in range(k) for j in range(3)]

    def conv_channel(c):
        # Conv2d(1, C, (k, 3)) output row for channel c: a 3k-term VPU FMA.
        conv_c = jnp.zeros((tb, P), jnp.float32) + cbias_ref[c]
        for idx, win in enumerate(wins):
            conv_c = conv_c + convw_ref[c * (3 * k) + idx] * win
        return conv_c

    # Linear(C*P -> 1) folded in as acc += tanh(conv_c) * lin_w[c, :]
    # (PyTorch's c*P+p flatten).
    # TODO(synk): nn.Dropout(p) omitted (eval-mode / deterministic identity).
    if C <= _UNROLL_C_MAX:
        lw = linw_ref[...]                              # (C, P) f32, grid-resident
        acc = jnp.zeros((tb, P), jnp.float32)
        for c in range(C):
            acc = acc + jnp.tanh(conv_channel(c)) * lw[c:c + 1, :]
    else:
        def body(c, acc):
            lw_c = linw_ref[pl.ds(c, 1), :]             # (1, P) dyn sublane slice
            return acc + jnp.tanh(conv_channel(c)) * lw_c
        acc = jax.lax.fori_loop(0, C, body,
                                jnp.zeros((tb, P), jnp.float32), unroll=4)

    # Lane-dense score row: one XLU transpose of the (tb, P) accumulator plus
    # a sublane reduce (replaces the old O(tb^2) diag-mask relayout).
    score_row = jnp.sum(jnp.transpose(acc), axis=0, keepdims=True) + linb_ref[0]
    score3 = score_row[None]                            # (1, 1, tb)
    score_ref[...] = score3

    # Softplus(score * labels), numerically stable, lane-dense.
    z = score3 * labels_ref[...]
    logit_ref[...] = jnp.maximum(z, 0.0) + jnp.log1p(jnp.exp(-jnp.abs(z)))


# ------------------------------ call wrapper -------------------------------- #

def _pick_tb(B):
    # Multiple-of-16 tiles (bf16 sublane packing), up to 2048 rows.  Prefer the
    # largest tile that keeps an EVEN number of grid steps (>= 2) so v7x's two
    # TensorCores split the "parallel" batch axis evenly and the pipeline
    # double-buffers the input DMA.
    best_odd = None
    for cand in (2048, 1024, 512, 256, 128, 64, 32, 16):
        if B % cand:
            continue
        g = B // cand
        if g < 2:
            continue
        if g % 2 == 0:
            return cand
        if best_odd is None:
            best_odd = cand
    return best_odd if best_odd is not None else B


def _vmem_limit_bytes(tb, D, P, C, k, in_itemsize):
    # Working set: double-buffered h/r/t blocks + lane-dense label/score/logit
    # rows + resident lin_w + in-kernel f32 temporaries (3k windows, conv_c,
    # acc, transposed acc).  Request ~1.5x that (no 32 MiB floor; v7x only has
    # 64 MiB physical VMEM), with a small floor for compiler internal scratch.
    pad = lambda n, m: -(-n // m) * m
    emb_blk = pad(tb, 16) * pad(D, 128) * in_itemsize
    row_blk = 8 * pad(tb, 128) * 4
    weights = pad(C, 8) * pad(P, 128) * 4
    temps = (3 * k + 4) * pad(tb, 8) * pad(P, 128) * 4
    need = 2 * (3 * emb_blk + 3 * row_blk) + weights + temps
    return int(min(max(need + need // 2, 8 << 20), 48 << 20))


def convkb_score_and_logits(h, r, t, conv_w, conv_b, lin_w, lin_b, labels,
                            kernel_size, *, tb=None, input_dtype=jnp.bfloat16):
    B, D = h.shape
    C = conv_w.shape[0]
    k = kernel_size
    P = D - k + 1
    tb = _pick_tb(B) if tb is None else tb
    assert B % tb == 0
    G = B // tb

    # ---- glue: layout plumbing only (no compute, no im2col duplication) ----
    # The take+astype upstream fuses into a single bf16 gather write in XLA.
    h_in = h.astype(input_dtype)                         # bf16 DMA (mem-bound win)
    r_in = r.astype(input_dtype)
    t_in = t.astype(input_dtype)
    convw_flat = conv_w.reshape(C * k * 3).astype(jnp.float32)  # 1-D SMEM table
    cbias = conv_b.reshape(C).astype(jnp.float32)                # (C,)  SMEM
    linb = lin_b.reshape(1).astype(jnp.float32)                  # (1,)  SMEM
    linw_cp = lin_w.reshape(C, P).astype(jnp.float32)            # (C,P): c*P+p
    labels3 = jnp.reshape(labels, (G, 1, tb)).astype(jnp.float32)  # lane-dense

    score, logit = pl.pallas_call(
        _convkb_kernel,
        out_shape=(jax.ShapeDtypeStruct((G, 1, tb), jnp.float32),
                   jax.ShapeDtypeStruct((G, 1, tb), jnp.float32)),
        grid_spec=pltpu.PrefetchScalarGridSpec(
            num_scalar_prefetch=0,
            grid=(G,),
            in_specs=[
                pl.BlockSpec(memory_space=pltpu.MemorySpace.SMEM),   # conv W (flat)
                pl.BlockSpec(memory_space=pltpu.MemorySpace.SMEM),   # conv b
                pl.BlockSpec(memory_space=pltpu.MemorySpace.SMEM),   # lin  b
                pl.BlockSpec((C, P), lambda i: (0, 0)),              # lin  W (VMEM)
                pl.BlockSpec((tb, D), lambda i: (i, 0)),             # h
                pl.BlockSpec((tb, D), lambda i: (i, 0)),             # r
                pl.BlockSpec((tb, D), lambda i: (i, 0)),             # t
                pl.BlockSpec((1, 1, tb), lambda i: (i, 0, 0)),       # labels
            ],
            out_specs=[
                pl.BlockSpec((1, 1, tb), lambda i: (i, 0, 0)),       # score
                pl.BlockSpec((1, 1, tb), lambda i: (i, 0, 0)),       # softplus logits
            ],
        ),
        compiler_params=pltpu.CompilerParams(
            dimension_semantics=("parallel",),
            vmem_limit_bytes=_vmem_limit_bytes(
                tb, D, P, C, k, jnp.dtype(input_dtype).itemsize)),
    )(convw_flat, cbias, linb, linw_cp, h_in, r_in, t_in, labels3)

    return score.reshape(B, 1), logit.reshape(B, 1)


# ------------------------------ module wrapper ------------------------------ #

def convkb_forward(params, triples, labels, *, kernel_size, lmbda, tb=None):
    """Returns (loss, score) matching ConvKB.forward (plus raw scores)."""
    # TODO(synk): fuse this gather into the kernel (scalar-prefetch triples +
    # embedding tables as memory_space=pl.ANY + manual double-buffered row
    # DMAs) to avoid writing and re-reading h/r/t through HBM (~2x traffic on
    # the dominant stream for small C,k).
    h = jnp.take(params["ent_emb"], triples[:, 0], axis=0)
    r = jnp.take(params["rel_emb"], triples[:, 1], axis=0)
    t = jnp.take(params["ent_emb"], triples[:, 2], axis=0)

    score, logits = convkb_score_and_logits(
        h, r, t, params["conv_w"], params["conv_b"],
        params["lin_w"], params["lin_b"], labels, kernel_size, tb=tb)

    # Regularizer (tiny; plain JAX glue, full f32 precision).
    l2 = jnp.mean(h ** 2) + jnp.mean(t ** 2) + jnp.mean(r ** 2)
    for W in (params["conv_w"], params["conv_b"],
              params["lin_w"], params["lin_b"]):
        l2 = l2 + jnp.sqrt(jnp.sum(W.astype(jnp.float32) ** 2))

    loss = jnp.mean(logits) + lmbda * l2
    return loss, score


# ------------------------------ reference (pure JAX) ------------------------ #

def reference_score(h, r, t, conv_w, conv_b, lin_w, lin_b, kernel_size):
    B, D = h.shape
    C = conv_w.shape[0]
    P = D - kernel_size + 1
    x = jnp.stack([h, r, t], axis=-1)[:, None, :, :]           # (B,1,D,3) NCHW
    out = jax.lax.conv_general_dilated(
        x, conv_w, window_strides=(1, 1), padding="VALID",
        dimension_numbers=("NCHW", "OIHW", "NCHW"))            # (B,C,P,1)
    out = out + conv_b[None, :, None, None]
    hidden = jnp.tanh(out.reshape(B, C * P))                   # c*P+p order
    return hidden @ lin_w.T + lin_b


# ------------------------------ init / test helpers ------------------------- #

def xavier_uniform(key, shape, fan_in, fan_out):
    limit = float(np.sqrt(6.0 / (fan_in + fan_out)))
    return jax.random.uniform(key, shape, jnp.float32, -limit, limit)


def _make_params(key, num_entities, num_relations, D, C, k):
    P = D - k + 1
    k_ent, k_rel, k_cw, k_cb, k_lw, k_lb = jax.random.split(key, 6)
    return {
        "ent_emb": xavier_uniform(k_ent, (num_entities, D), D, num_entities),
        "rel_emb": xavier_uniform(k_rel, (num_relations, D), D, num_relations),
        "conv_w": xavier_uniform(k_cw, (C, 1, k, 3), 1 * k * 3, C * k * 3),
        "conv_b": 0.01 * jax.random.normal(k_cb, (C,), jnp.float32),
        "lin_w": xavier_uniform(k_lw, (1, P * C), P * C, 1),
        "lin_b": 0.01 * jax.random.normal(k_lb, (1,), jnp.float32),
    }


def _check_case(*, num_entities, num_relations, D, C, k, B, lmbda, seed):
    key = jax.random.PRNGKey(seed)
    k_par, k_trip, k_lab = jax.random.split(key, 3)
    params = _make_params(k_par, num_entities, num_relations, D, C, k)

    heads = jax.random.randint(k_trip, (B,), 0, num_entities)
    rels = jax.random.randint(jax.random.fold_in(k_trip, 1), (B,), 0, num_relations)
    tails = jax.random.randint(jax.random.fold_in(k_trip, 2), (B,), 0, num_entities)
    triples = jnp.stack([heads, rels, tails], axis=1)          # (B, 3) int32
    labels = jnp.where(jax.random.bernoulli(k_lab, 0.5, (B,)), 1.0, -1.0)

    loss, score = convkb_forward(params, triples, labels,
                                 kernel_size=k, lmbda=lmbda)
    jax.block_until_ready((loss, score))

    # Correctness check vs. pure-JAX reference.  The kernel deliberately ships
    # h/r/t as bf16 (HBM-bandwidth win) and computes in f32; the reference uses
    # identically quantized embeddings so tolerances stay tight.
    h = jnp.take(params["ent_emb"], triples[:, 0], axis=0)
    r = jnp.take(params["rel_emb"], triples[:, 1], axis=0)
    t = jnp.take(params["ent_emb"], triples[:, 2], axis=0)
    hq = h.astype(jnp.bfloat16).astype(jnp.float32)
    rq = r.astype(jnp.bfloat16).astype(jnp.float32)
    tq = t.astype(jnp.bfloat16).astype(jnp.float32)
    ref_score = reference_score(hq, rq, tq, params["conv_w"], params["conv_b"],
                                params["lin_w"], params["lin_b"], k)
    ref_logits = jax.nn.softplus(ref_score * labels.reshape(B, 1))
    ref_l2 = jnp.mean(h ** 2) + jnp.mean(t ** 2) + jnp.mean(r ** 2)
    for W in (params["conv_w"], params["conv_b"],
              params["lin_w"], params["lin_b"]):
        ref_l2 = ref_l2 + jnp.sqrt(jnp.sum(W ** 2))
    ref_loss = jnp.mean(ref_logits) + lmbda * ref_l2

    np.testing.assert_allclose(np.asarray(score), np.asarray(ref_score),
                               rtol=1e-4, atol=1e-4)
    np.testing.assert_allclose(np.asarray(loss), np.asarray(ref_loss),
                               rtol=1e-4, atol=1e-4)


# ----------------------------------- main ----------------------------------- #

if __name__ == "__main__":
    # Case 1: small C -> fully unrolled channel loop, k=1 (aligned windows).
    _check_case(num_entities=20, num_relations=5, D=32, C=4, k=1,
                B=64, lmbda=0.1, seed=0)
    # Case 2: larger C -> partially-unrolled fori_loop path, k=2 (shifted
    # windows + dynamic SMEM weight reads + pl.ds lin_w slice).
    _check_case(num_entities=20, num_relations=5, D=32, C=12, k=2,
                B=64, lmbda=0.2, seed=1)
    print("KERNEL_OK")
</pallas_src>

<mosaic_0001>
module attributes {stable_mosaic.version = 11 : i64} {
  func.func @_convkb_kernel(%arg0: i32, %arg1: memref<12xf32, #tpu.memory_space<smem>>, %arg2: memref<4xf32, #tpu.memory_space<smem>>, %arg3: memref<1xf32, #tpu.memory_space<smem>>, %arg4: memref<4x32xf32, #tpu.memory_space<vmem>>, %arg5: memref<32x32xbf16, #tpu.memory_space<vmem>>, %arg6: memref<32x32xbf16, #tpu.memory_space<vmem>>, %arg7: memref<32x32xbf16, #tpu.memory_space<vmem>>, %arg8: memref<1x1x32xf32, #tpu.memory_space<vmem>>, %arg9: memref<1x1x32xf32, #tpu.memory_space<vmem>>, %arg10: memref<1x1x32xf32, #tpu.memory_space<vmem>>) attributes {dimension_semantics = [#tpu.dimension_semantics<parallel>], iteration_bounds = array<i64: 2>, scalar_prefetch = 0 : i64, scratch_operands = 0 : i64, tpu.core_type = #tpu.core_type<tc>, window_params = [{transform_indices = @transform_0, window_bounds = array<i64: 12>}, {transform_indices = @transform_1, window_bounds = array<i64: 4>}, {transform_indices = @transform_2, window_bounds = array<i64: 1>}, {pipeline_mode = #tpu.pipeline_mode<synchronous>, transform_indices = @transform_3, window_bounds = array<i64: 4, 32>}, {transform_indices = @transform_4, window_bounds = array<i64: 32, 32>}, {transform_indices = @transform_5, window_bounds = array<i64: 32, 32>}, {transform_indices = @transform_6, window_bounds = array<i64: 32, 32>}, {transform_indices = @transform_7, window_bounds = array<i64: 1, 1, 32>}, {transform_indices = @transform_8, window_bounds = array<i64: 1, 1, 32>}, {transform_indices = @transform_9, window_bounds = array<i64: 1, 1, 32>}]} {
    %c0 = arith.constant 0 : index
    %c0_0 = arith.constant 0 : index
    %0 = vector.load %arg5[%c0, %c0_0] : memref<32x32xbf16, #tpu.memory_space<vmem>>, vector<32x32xbf16>
    %1 = arith.extf %0 : vector<32x32xbf16> to vector<32x32xf32>
    %c0_1 = arith.constant 0 : index
    %c0_2 = arith.constant 0 : index
    %2 = vector.load %arg6[%c0_1, %c0_2] : memref<32x32xbf16, #tpu.memory_space<vmem>>, vector<32x32xbf16>
    %3 = arith.extf %2 : vector<32x32xbf16> to vector<32x32xf32>
    %c0_3 = arith.constant 0 : index
    %c0_4 = arith.constant 0 : index
    %4 = vector.load %arg7[%c0_3, %c0_4] : memref<32x32xbf16, #tpu.memory_space<vmem>>, vector<32x32xbf16>
    %5 = arith.extf %4 : vector<32x32xbf16> to vector<32x32xf32>
    %c0_5 = arith.constant 0 : index
    %c0_6 = arith.constant 0 : index
    %6 = vector.load %arg4[%c0_5, %c0_6] : memref<4x32xf32, #tpu.memory_space<vmem>>, vector<4x32xf32>
    %cst = arith.constant 0.000000e+00 : f32
    %7 = vector.broadcast %cst : f32 to vector<32x32xf32>
    %cst_7 = arith.constant 0.000000e+00 : f32
    %8 = vector.broadcast %cst_7 : f32 to vector<32x32xf32>
    %c0_8 = arith.constant 0 : index
    %9 = memref.load %arg2[%c0_8] : memref<4xf32, #tpu.memory_space<smem>>
    %10 = vector.broadcast %9 : f32 to vector<32x32xf32>
    %11 = arith.addf %8, %10 : vector<32x32xf32>
    %c0_9 = arith.constant 0 : index
    %12 = memref.load %arg1[%c0_9] : memref<12xf32, #tpu.memory_space<smem>>
    %13 = vector.broadcast %12 : f32 to vector<32x32xf32>
    %14 = arith.mulf %13, %1 : vector<32x32xf32>
    %15 = arith.addf %11, %14 : vector<32x32xf32>
    %c1 = arith.constant 1 : index
    %16 = memref.load %arg1[%c1] : memref<12xf32, #tpu.memory_space<smem>>
    %17 = vector.broadcast %16 : f32 to vector<32x32xf32>
    %18 = arith.mulf %17, %3 : vector<32x32xf32>
    %19 = arith.addf %15, %18 : vector<32x32xf32>
    %c2 = arith.constant 2 : index
    %20 = memref.load %arg1[%c2] : memref<12xf32, #tpu.memory_space<smem>>
    %21 = vector.broadcast %20 : f32 to vector<32x32xf32>
    %22 = arith.mulf %21, %5 : vector<32x32xf32>
    %23 = arith.addf %19, %22 : vector<32x32xf32>
    %24 = math.tanh %23 : vector<32x32xf32>
    %25 = vector.extract_strided_slice %6 {offsets = [0, 0], sizes = [1, 32], strides = [1, 1]} : vector<4x32xf32> to vector<1x32xf32>
    %26 = vector.broadcast %25 : vector<1x32xf32> to vector<32x32xf32>
    %27 = arith.mulf %24, %26 : vector<32x32xf32>
    %28 = arith.addf %7, %27 : vector<32x32xf32>
    %cst_10 = arith.constant 0.000000e+00 : f32
    %29 = vector.broadcast %cst_10 : f32 to vector<32x32xf32>
    %c1_11 = arith.constant 1 : index
    %30 = memref.load %arg2[%c1_11] : memref<4xf32, #tpu.memory_space<smem>>
    %31 = vector.broadcast %30 : f32 to vector<32x32xf32>
    %32 = arith.addf %29, %31 : vector<32x32xf32>
    %c3 = arith.constant 3 : index
    %33 = memref.load %arg1[%c3] : memref<12xf32, #tpu.memory_space<smem>>
    %34 = vector.broadcast %33 : f32 to vector<32x32xf32>
    %35 = arith.mulf %34, %1 : vector<32x32xf32>
    %36 = arith.addf %32, %35 : vector<32x32xf32>
    %c4 = arith.constant 4 : index
    %37 = memref.load %arg1[%c4] : memref<12xf32, #tpu.memory_space<smem>>
    %38 = vector.broadcast %37 : f32 to vector<32x32xf32>
    %39 = arith.mulf %38, %3 : vector<32x32xf32>
    %40 = arith.addf %36, %39 : vector<32x32xf32>
    %c5 = arith.constant 5 : index
    %41 = memref.load %arg1[%c5] : memref<12xf32, #tpu.memory_space<smem>>
    %42 = vector.broadcast %41 : f32 to vector<32x32xf32>
    %43 = arith.mulf %42, %5 : vector<32x32xf32>
    %44 = arith.addf %40, %43 : vector<32x32xf32>
    %45 = math.tanh %44 : vector<32x32xf32>
    %46 = vector.extract_strided_slice %6 {offsets = [1, 0], sizes = [1, 32], strides = [1, 1]} : vector<4x32xf32> to vector<1x32xf32>
    %47 = vector.broadcast %46 : vector<1x32xf32> to vector<32x32xf32>
    %48 = arith.mulf %45, %47 : vector<32x32xf32>
    %49 = arith.addf %28, %48 : vector<32x32xf32>
    %cst_12 = arith.constant 0.000000e+00 : f32
    %50 = vector.broadcast %cst_12 : f32 to vector<32x32xf32>
    %c2_13 = arith.constant 2 : index
    %51 = memref.load %arg2[%c2_13] : memref<4xf32, #tpu.memory_space<smem>>
    %52 = vector.broadcast %51 : f32 to vector<32x32xf32>
    %53 = arith.addf %50, %52 : vector<32x32xf32>
    %c6 = arith.constant 6 : index
    %54 = memref.load %arg1[%c6] : memref<12xf32, #tpu.memory_space<smem>>
    %55 = vector.broadcast %54 : f32 to vector<32x32xf32>
    %56 = arith.mulf %55, %1 : vector<32x32xf32>
    %57 = arith.addf %53, %56 : vector<32x32xf32>
    %c7 = arith.constant 7 : index
    %58 = memref.load %arg1[%c7] : memref<12xf32, #tpu.memory_space<smem>>
    %59 = vector.broadcast %58 : f32 to vector<32x32xf32>
    %60 = arith.mulf %59, %3 : vector<32x32xf32>
    %61 = arith.addf %57, %60 : vector<32x32xf32>
    %c8 = arith.constant 8 : index
    %62 = memref.load %arg1[%c8] : memref<12xf32, #tpu.memory_space<smem>>
    %63 = vector.broadcast %62 : f32 to vector<32x32xf32>
    %64 = arith.mulf %63, %5 : vector<32x32xf32>
    %65 = arith.addf %61, %64 : vector<32x32xf32>
    %66 = math.tanh %65 : vector<32x32xf32>
    %67 = vector.extract_strided_slice %6 {offsets = [2, 0], sizes = [1, 32], strides = [1, 1]} : vector<4x32xf32> to vector<1x32xf32>
    %68 = vector.broadcast %67 : vector<1x32xf32> to vector<32x32xf32>
    %69 = arith.mulf %66, %68 : vector<32x32xf32>
    %70 = arith.addf %49, %69 : vector<32x32xf32>
    %cst_14 = arith.constant 0.000000e+00 : f32
    %71 = vector.broadcast %cst_14 : f32 to vector<32x32xf32>
    %c3_15 = arith.constant 3 : index
    %72 = memref.load %arg2[%c3_15] : memref<4xf32, #tpu.memory_space<smem>>
    %73 = vector.broadcast %72 : f32 to vector<32x32xf32>
    %74 = arith.addf %71, %73 : vector<32x32xf32>
    %c9 = arith.constant 9 : index
    %75 = memref.load %arg1[%c9] : memref<12xf32, #tpu.memory_space<smem>>
    %76 = vector.broadcast %75 : f32 to vector<32x32xf32>
    %77 = arith.mulf %76, %1 : vector<32x32xf32>
    %78 = arith.addf %74, %77 : vector<32x32xf32>
    %c10 = arith.constant 10 : index
    %79 = memref.load %arg1[%c10] : memref<12xf32, #tpu.memory_space<smem>>
    %80 = vector.broadcast %79 : f32 to vector<32x32xf32>
    %81 = arith.mulf %80, %3 : vector<32x32xf32>
    %82 = arith.addf %78, %81 : vector<32x32xf32>
    %c11 = arith.constant 11 : index
    %83 = memref.load %arg1[%c11] : memref<12xf32, #tpu.memory_space<smem>>
    %84 = vector.broadcast %83 : f32 to vector<32x32xf32>
    %85 = arith.mulf %84, %5 : vector<32x32xf32>
    %86 = arith.addf %82, %85 : vector<32x32xf32>
    %87 = math.tanh %86 : vector<32x32xf32>
    %88 = vector.extract_strided_slice %6 {offsets = [3, 0], sizes = [1, 32], strides = [1, 1]} : vector<4x32xf32> to vector<1x32xf32>
    %89 = vector.broadcast %88 : vector<1x32xf32> to vector<32x32xf32>
    %90 = arith.mulf %87, %89 : vector<32x32xf32>
    %91 = arith.addf %70, %90 : vector<32x32xf32>
    %92 = tpu.transpose %91, [1, 0] : vector<32x32xf32> -> vector<32x32xf32>
    %cst_16 = arith.constant dense<0.000000e+00> : vector<32xf32>
    %93 = vector.multi_reduction <add>, %92, %cst_16 [0] : vector<32x32xf32> to vector<32xf32>
    %94 = vector.shape_cast %93 : vector<32xf32> to vector<1x32xf32>
    %c0_17 = arith.constant 0 : index
    %95 = memref.load %arg3[%c0_17] : memref<1xf32, #tpu.memory_space<smem>>
    %96 = vector.broadcast %95 : f32 to vector<1x32xf32>
    %97 = arith.addf %94, %96 : vector<1x32xf32>
    %98 = vector.shape_cast %97 : vector<1x32xf32> to vector<1x1x32xf32>
    %c0_18 = arith.constant 0 : index
    %c0_19 = arith.constant 0 : index
    %c0_20 = arith.constant 0 : index
    %99 = vector.load %arg9[%c0_18, %c0_19, %c0_20] : memref<1x1x32xf32, #tpu.memory_space<vmem>>, vector<1x1x32xf32>
    tpu.vector_store %arg9[%c0_18, %c0_19, %c0_20], %98 {strides = array<i32>} : memref<1x1x32xf32, #tpu.memory_space<vmem>>, vector<1x1x32xf32>,
    %c0_21 = arith.constant 0 : index
    %c0_22 = arith.constant 0 : index
    %c0_23 = arith.constant 0 : index
    %100 = vector.load %arg8[%c0_21, %c0_22, %c0_23] : memref<1x1x32xf32, #tpu.memory_space<vmem>>, vector<1x1x32xf32>
    %101 = arith.mulf %98, %100 : vector<1x1x32xf32>
    %cst_24 = arith.constant 0.000000e+00 : f32
    %102 = vector.broadcast %cst_24 : f32 to vector<1x1x32xf32>
    %103 = arith.maximumf %101, %102 : vector<1x1x32xf32>
    %104 = math.absf %101 : vector<1x1x32xf32>
    %cst_25 = arith.constant 0.000000e+00 : f32
    %105 = vector.broadcast %cst_25 : f32 to vector<1x1x32xf32>
    %106 = arith.subf %105, %104 : vector<1x1x32xf32>
    %107 = math.exp %106 : vector<1x1x32xf32>
    %108 = math.log1p %107 : vector<1x1x32xf32>
    %109 = arith.addf %103, %108 : vector<1x1x32xf32>
    %c0_26 = arith.constant 0 : index
    %c0_27 = arith.constant 0 : index
    %c0_28 = arith.constant 0 : index
    %110 = vector.load %arg10[%c0_26, %c0_27, %c0_28] : memref<1x1x32xf32, #tpu.memory_space<vmem>>, vector<1x1x32xf32>
    tpu.vector_store %arg10[%c0_26, %c0_27, %c0_28], %109 {strides = array<i32>} : memref<1x1x32xf32, #tpu.memory_space<vmem>>, vector<1x1x32xf32>,
    return
  }
  func.func @transform_0(%arg0: i32) -> i32 {
    %c0_i32 = arith.constant 0 : i32
    %c0_i32_0 = arith.constant 0 : i32
    return %c0_i32 : i32
  }
  func.func @transform_1(%arg0: i32) -> i32 {
    %c0_i32 = arith.constant 0 : i32
    %c0_i32_0 = arith.constant 0 : i32
    return %c0_i32 : i32
  }
  func.func @transform_2(%arg0: i32) -> i32 {
    %c0_i32 = arith.constant 0 : i32
    %c0_i32_0 = arith.constant 0 : i32
    return %c0_i32 : i32
  }
  func.func @transform_3(%arg0: i32) -> (i32, i32) {
    %c0_i32 = arith.constant 0 : i32
    %c0_i32_0 = arith.constant 0 : i32
    %c0_i32_1 = arith.constant 0 : i32
    return %c0_i32, %c0_i32_0 : i32, i32
  }
  func.func @transform_4(%arg0: i32) -> (i32, i32) {
    %c0_i32 = arith.constant 0 : i32
    %c0_i32_0 = arith.constant 0 : i32
    return %arg0, %c0_i32 : i32, i32
  }
  func.func @transform_5(%arg0: i32) -> (i32, i32) {
    %c0_i32 = arith.constant 0 : i32
    %c0_i32_0 = arith.constant 0 : i32
    return %arg0, %c0_i32 : i32, i32
  }
  func.func @transform_6(%arg0: i32) -> (i32, i32) {
    %c0_i32 = arith.constant 0 : i32
    %c0_i32_0 = arith.constant 0 : i32
    return %arg0, %c0_i32 : i32, i32
  }
  func.func @transform_7(%arg0: i32) -> (i32, i32, i32) {
    %c0_i32 = arith.constant 0 : i32
    %c0_i32_0 = arith.constant 0 : i32
    %c0_i32_1 = arith.constant 0 : i32
    return %arg0, %c0_i32, %c0_i32_0 : i32, i32, i32
  }
  func.func @transform_8(%arg0: i32) -> (i32, i32, i32) {
    %c0_i32 = arith.constant 0 : i32
    %c0_i32_0 = arith.constant 0 : i32
    %c0_i32_1 = arith.constant 0 : i32
    return %arg0, %c0_i32, %c0_i32_0 : i32, i32, i32
  }
  func.func @transform_9(%arg0: i32) -> (i32, i32, i32) {
    %c0_i32 = arith.constant 0 : i32
    %c0_i32_0 = arith.constant 0 : i32
    %c0_i32_1 = arith.constant 0 : i32
    return %arg0, %c0_i32, %c0_i32_0 : i32, i32, i32
  }
}

</mosaic_0001>

<llo_original>
// kernel: tpu_custom_call.1
$region0: #{tpu_custom_call.1}
  #allocation0 [shape = 'u32[]', space=smem, size = 0x4, offset = 0x4, fixed_abs, tag = 'smem constant byte address 0x4 - core index']
  #allocation1 [shape = 'u32[144,128]{1,0:T(1,128)}', space=vmem, size = 0x12000, scoped, tag = 'internal scratch']
  #allocation2 [shape = 'f32[1]{0:T(128)S(6)}', space=smem, size = 0x200, scoped, tag = 'scoped memory for tpu_custom_call.1']
  %s0 = inlined_call_operand.vmem [shape: f32[12], index: 0, kind: input, shape index: {}]
  %s1 = inlined_call_operand.vmem [shape: f32[4], index: 1, kind: input, shape index: {}]
  %s2 = inlined_call_operand.<no memory space> [shape: f32[1], index: 2, kind: input, shape index: {}]
  %s3 = inlined_call_operand.vmem [shape: f32[4,32], index: 3, kind: input, shape index: {}]
  %s4 = inlined_call_operand.vmem [shape: bf16[64,32], index: 4, kind: input, shape index: {}]
  %s5 = inlined_call_operand.vmem [shape: bf16[64,32], index: 5, kind: input, shape index: {}]
  %s6 = inlined_call_operand.vmem [shape: bf16[64,32], index: 6, kind: input, shape index: {}]
  %s7 = inlined_call_operand.vmem [shape: f32[2,1,32], index: 7, kind: input, shape index: {}]
  %s8 = inlined_call_operand.hbm [shape: f32[2,1,32], index: 8, kind: output, shape index: {0}]
  %s9 = inlined_call_operand.hbm [shape: f32[2,1,32], index: 9, kind: output, shape index: {1}]
  %10 = xla_tuple %s8, %s9
  %s11 = sld [smem:[#allocation0]]
  $region81: #{tpu_custom_call.1} parent=0
    _
  %s13 = ssub.s32 1, %s11
  %s14 = scalar_select 0, %s13, %s11
  %15 = sst [smem:[#allocation2]] %s2
  $region1: #{tpu_custom_call.1} parent=0
    #allocation3 [shape = 'u8[512]{0}', space=smem, size = 0x200, scoped, tag = 'input window, operand 0, single buffered']
    #allocation4 [shape = 's32[2]{0}', space=sflag, size = 0x8, scoped, tag = 'scoped memory for tpu_custom_call.1']
    #allocation5 [shape = 's32[2]{0}', space=sflag, size = 0x8, scoped, tag = 'scoped memory for tpu_custom_call.1']
    #allocation6 [shape = 'u8[512]{0}', space=smem, size = 0x200, scoped, tag = 'input window, operand 1, single buffered']
    #allocation7 [shape = 's32[1]{0}', space=sflag, size = 0x4, scoped, tag = 'scoped memory for tpu_custom_call.1']
    #allocation8 [shape = 'u8[1024]{0}', space=vmem, size = 0x400, scoped, tag = 'output window, operand 0']
    #allocation9 [shape = 'u8[1024]{0}', space=vmem, size = 0x400, scoped, tag = 'output window, operand 1']
    #allocation10 [shape = 's32[2]{0}', space=sflag, size = 0x8, scoped, tag = 'scoped memory for tpu_custom_call.1']
    %16 = vsyncpa [#allocation5], 0
    %17 = vsyncpa [#allocation7], 0
    %18 = vsyncpa [#allocation4], 0
    %s19 = scalar_lea.sflag [#allocation4], 1
    %20 = vsyncpa %s19, 0
    %21 = vsyncpa [#allocation10], 0
    %s22 = scalar_lea.sflag [#allocation10], 1
    %23 = vsyncpa %s22, 0
    loop: start=0, step=1, limit=4
    $region2: #{tpu_custom_call.1} parent=1 // loop_pre_header
      _
    $region3: #{tpu_custom_call.1} parent=1 // loop_header
      %s25 = sphi 0, %s29
      %p26 = scmp.ge.s32.totalorder %s25, 4
      %s33 = sphi 0, %s33
      %s35 = sphi 0, %s33
      %s36 = sphi 0, %s35
      %s50 = sphi 0, %s36
      %s54 = sphi 0, %s54
      %s56 = sphi 0, %s54
      %s57 = sphi 0, %s56
      %s71 = sphi 0, %s57
      %s75 = sphi 0, %s75
      %s77 = sphi 0, %s75
      %s78 = sphi 0, %s77
      %s92 = sphi 0, %s78
      %s96 = sphi 0, %s96
      %s98 = sphi 0, %s96
      %s99 = sphi 0, %s98
      %s113 = sphi 0, %s99
      %s119 = sphi 0, %s121
      %s122 = sphi 0, %s119
      %s123 = sphi 0, %s122
      %s139 = sphi 0, %s123
      %s145 = sphi 0, %s147
      %s148 = sphi 0, %s145
      %s149 = sphi 0, %s148
      %s165 = sphi 0, %s149
      %s171 = sphi 0, %s173
      %s174 = sphi 0, %s171
      %s175 = sphi 0, %s174
      %s191 = sphi 0, %s175
      %s197 = sphi 0, %s199
      %s200 = sphi 0, %s197
      %s201 = sphi 0, %s200
      %s217 = sphi 0, %s201
      %s223 = sphi 0, %s225
      %s226 = sphi 0, %s223
      %s227 = sphi 0, %s226
      %s243 = sphi 0, %s227
      %s249 = sphi 0, %s251
      %s252 = sphi 0, %s249
      %s253 = sphi 0, %s252
      %s269 = sphi 0, %s253
    $region4: #{tpu_custom_call.1} parent=1 // loop_header_branch
      %28 = sbr.rel (%p26) target = $region8
    $region5: #{tpu_custom_call.1} parent=1 // loop_body
      %s30 = ssub.s32 %s25, 1
      %s31 = ssub.s32 %s25, 2
      %s32 = sadd.s32 %s25, 1
      %s34 = sadd.s32 %s33, 1
      %p37 = scmp.eq.s32.totalorder %s25, 1
      %p38 = scmp.ne.s32.totalorder %s33, %s35
      %p39 = scmp.eq.s32.totalorder %s25, 0
      %p40 = por %p38, %p39
      %p41 = scmp.ne.s32.totalorder %s33, %s35
      %p42 = scmp.eq.s32.totalorder %s30, 1
      %p43 = por %p41, %p42
      %p44 = scmp.ne.s32.totalorder %s35, %s36
      %p45 = scmp.eq.s32.totalorder %s30, 0
      %p46 = por %p44, %p45
      %p47 = scmp.ne.s32.totalorder %s35, %s36
      %p48 = scmp.eq.s32.totalorder %s31, 1
      %p49 = por %p47, %p48
      %p51 = scmp.ne.s32.totalorder %s36, %s50
      %p52 = scmp.eq.s32.totalorder %s31, 0
      %p53 = por %p51, %p52
      %s55 = sadd.s32 %s54, 1
      %p58 = scmp.eq.s32.totalorder %s25, 1
      %p59 = scmp.ne.s32.totalorder %s54, %s56
      %p60 = scmp.eq.s32.totalorder %s25, 0
      %p61 = por %p59, %p60
      %p62 = scmp.ne.s32.totalorder %s54, %s56
      %p63 = scmp.eq.s32.totalorder %s30, 1
      %p64 = por %p62, %p63
      %p65 = scmp.ne.s32.totalorder %s56, %s57
      %p66 = scmp.eq.s32.totalorder %s30, 0
      %p67 = por %p65, %p66
      %p68 = scmp.ne.s32.totalorder %s56, %s57
      %p69 = scmp.eq.s32.totalorder %s31, 1
      %p70 = por %p68, %p69
      %p72 = scmp.ne.s32.totalorder %s57, %s71
      %p73 = scmp.eq.s32.totalorder %s31, 0
      %p74 = por %p72, %p73
      %s76 = sadd.s32 %s75, 1
      %p79 = scmp.eq.s32.totalorder %s25, 1
      %p80 = scmp.ne.s32.totalorder %s75, %s77
      %p81 = scmp.eq.s32.totalorder %s25, 0
      %p82 = por %p80, %p81
      %p83 = scmp.ne.s32.totalorder %s75, %s77
      %p84 = scmp.eq.s32.totalorder %s30, 1
      %p85 = por %p83, %p84
      %p86 = scmp.ne.s32.totalorder %s77, %s78
      %p87 = scmp.eq.s32.totalorder %s30, 0
      %p88 = por %p86, %p87
      %p89 = scmp.ne.s32.totalorder %s77, %s78
      %p90 = scmp.eq.s32.totalorder %s31, 1
      %p91 = por %p89, %p90
      %p93 = scmp.ne.s32.totalorder %s78, %s92
      %p94 = scmp.eq.s32.totalorder %s31, 0
      %p95 = por %p93, %p94
      %s97 = sadd.s32 %s96, 1
      %p100 = scmp.eq.s32.totalorder %s25, 1
      %p101 = scmp.ne.s32.totalorder %s96, %s98
      %p102 = scmp.eq.s32.totalorder %s25, 0
      %p103 = por %p101, %p102
      %p104 = scmp.ne.s32.totalorder %s96, %s98
      %p105 = scmp.eq.s32.totalorder %s30, 1
      %p106 = por %p104, %p105
      %p107 = scmp.ne.s32.totalorder %s98, %s99
      %p108 = scmp.eq.s32.totalorder %s30, 0
      %p109 = por %p107, %p108
      %p110 = scmp.ne.s32.totalorder %s98, %s99
      %p111 = scmp.eq.s32.totalorder %s31, 1
      %p112 = por %p110, %p111
      %p114 = scmp.ne.s32.totalorder %s99, %s113
      %p115 = scmp.eq.s32.totalorder %s31, 0
      %p116 = por %p114, %p115
      %s117 = ssub.s32 %s25, %s32
      %p118 = scmp.eq.s32.totalorder %s117, 0
      %s120 = sadd.s32 %s119, 1
      %s121 = scalar_select %p118, %s119, %s120
      %p124 = pneg %p118
      %p125 = scmp.eq.s32.totalorder %s25, 1
      %p126 = por %p124, %p125
      %p127 = scmp.ne.s32.totalorder %s119, %s122
      %p128 = scmp.eq.s32.totalorder %s25, 0
      %p129 = por %p127, %p128
      %p130 = scmp.ne.s32.totalorder %s119, %s122
      %p131 = scmp.eq.s32.totalorder %s30, 1
      %p132 = por %p130, %p131
      %p133 = scmp.ne.s32.totalorder %s122, %s123
      %p134 = scmp.eq.s32.totalorder %s30, 0
      %p135 = por %p133, %p134
      %p136 = scmp.ne.s32.totalorder %s122, %s123
      %p137 = scmp.eq.s32.totalorder %s31, 1
      %p138 = por %p136, %p137
      %p140 = scmp.ne.s32.totalorder %s123, %s139
      %p141 = scmp.eq.s32.totalorder %s31, 0
      %p142 = por %p140, %p141
      %s143 = ssub.s32 %s25, %s32
      %p144 = scmp.eq.s32.totalorder %s143, 0
      %s146 = sadd.s32 %s145, 1
      %s147 = scalar_select %p144, %s145, %s146
      %p150 = pneg %p144
      %p151 = scmp.eq.s32.totalorder %s25, 1
      %p152 = por %p150, %p151
      %p153 = scmp.ne.s32.totalorder %s145, %s148
      %p154 = scmp.eq.s32.totalorder %s25, 0
      %p155 = por %p153, %p154
      %p156 = scmp.ne.s32.totalorder %s145, %s148
      %p157 = scmp.eq.s32.totalorder %s30, 1
      %p158 = por %p156, %p157
      %p159 = scmp.ne.s32.totalorder %s148, %s149
      %p160 = scmp.eq.s32.totalorder %s30, 0
      %p161 = por %p159, %p160
      %p162 = scmp.ne.s32.totalorder %s148, %s149
      %p163 = scmp.eq.s32.totalorder %s31, 1
      %p164 = por %p162, %p163
      %p166 = scmp.ne.s32.totalorder %s149, %s165
      %p167 = scmp.eq.s32.totalorder %s31, 0
      %p168 = por %p166, %p167
      %s169 = ssub.s32 %s25, %s32
      %p170 = scmp.eq.s32.totalorder %s169, 0
      %s172 = sadd.s32 %s171, 1
      %s173 = scalar_select %p170, %s171, %s172
      %p176 = pneg %p170
      %p177 = scmp.eq.s32.totalorder %s25, 1
      %p178 = por %p176, %p177
      %p179 = scmp.ne.s32.totalorder %s171, %s174
      %p180 = scmp.eq.s32.totalorder %s25, 0
      %p181 = por %p179, %p180
      %p182 = scmp.ne.s32.totalorder %s171, %s174
      %p183 = scmp.eq.s32.totalorder %s30, 1
      %p184 = por %p182, %p183
      %p185 = scmp.ne.s32.totalorder %s174, %s175
      %p186 = scmp.eq.s32.totalorder %s30, 0
      %p187 = por %p185, %p186
      %p188 = scmp.ne.s32.totalorder %s174, %s175
      %p189 = scmp.eq.s32.totalorder %s31, 1
      %p190 = por %p188, %p189
      %p192 = scmp.ne.s32.totalorder %s175, %s191
      %p193 = scmp.eq.s32.totalorder %s31, 0
      %p194 = por %p192, %p193
      %s195 = ssub.s32 %s25, %s32
      %p196 = scmp.eq.s32.totalorder %s195, 0
      %s198 = sadd.s32 %s197, 1
      %s199 = scalar_select %p196, %s197, %s198
      %p202 = pneg %p196
      %p203 = scmp.eq.s32.totalorder %s25, 1
      %p204 = por %p202, %p203
      %p205 = scmp.ne.s32.totalorder %s197, %s200
      %p206 = scmp.eq.s32.totalorder %s25, 0
      %p207 = por %p205, %p206
      %p208 = scmp.ne.s32.totalorder %s197, %s200
      %p209 = scmp.eq.s32.totalorder %s30, 1
      %p210 = por %p208, %p209
      %p211 = scmp.ne.s32.totalorder %s200, %s201
      %p212 = scmp.eq.s32.totalorder %s30, 0
      %p213 = por %p211, %p212
      %p214 = scmp.ne.s32.totalorder %s200, %s201
      %p215 = scmp.eq.s32.totalorder %s31, 1
      %p216 = por %p214, %p215
      %p218 = scmp.ne.s32.totalorder %s201, %s217
      %p219 = scmp.eq.s32.totalorder %s31, 0
      %p220 = por %p218, %p219
      %s221 = ssub.s32 %s25, %s32
      %p222 = scmp.eq.s32.totalorder %s221, 0
      %s224 = sadd.s32 %s223, 1
      %s225 = scalar_select %p222, %s223, %s224
      %p228 = pneg %p222
      %p229 = scmp.eq.s32.totalorder %s25, 1
      %p230 = por %p228, %p229
      %p231 = scmp.ne.s32.totalorder %s223, %s226
      %p232 = scmp.eq.s32.totalorder %s25, 0
      %p233 = por %p231, %p232
      %p234 = scmp.ne.s32.totalorder %s223, %s226
      %p235 = scmp.eq.s32.totalorder %s30, 1
      %p236 = por %p234, %p235
      %p237 = scmp.ne.s32.totalorder %s226, %s227
      %p238 = scmp.eq.s32.totalorder %s30, 0
      %p239 = por %p237, %p238
      %p240 = scmp.ne.s32.totalorder %s226, %s227
      %p241 = scmp.eq.s32.totalorder %s31, 1
      %p242 = por %p240, %p241
      %p244 = scmp.ne.s32.totalorder %s227, %s243
      %p245 = scmp.eq.s32.totalorder %s31, 0
      %p246 = por %p244, %p245
      %s247 = ssub.s32 %s25, %s32
      %p248 = scmp.eq.s32.totalorder %s247, 0
      %s250 = sadd.s32 %s249, 1
      %s251 = scalar_select %p248, %s249, %s250
      %p254 = pneg %p248
      %p255 = scmp.eq.s32.totalorder %s25, 1
      %p256 = por %p254, %p255
      %p257 = scmp.ne.s32.totalorder %s249, %s252
      %p258 = scmp.eq.s32.totalorder %s25, 0
      %p259 = por %p257, %p258
      %p260 = scmp.ne.s32.totalorder %s249, %s252
      %p261 = scmp.eq.s32.totalorder %s30, 1
      %p262 = por %p260, %p261
      %p263 = scmp.ne.s32.totalorder %s252, %s253
      %p264 = scmp.eq.s32.totalorder %s30, 0
      %p265 = por %p263, %p264
      %p266 = scmp.ne.s32.totalorder %s252, %s253
      %p267 = scmp.eq.s32.totalorder %s31, 1
      %p268 = por %p266, %p267
      %p270 = scmp.ne.s32.totalorder %s253, %s269
      %p271 = scmp.eq.s32.totalorder %s31, 0
      %p272 = por %p270, %p271
      %p273 = scmp.le.s32.totalorder 1, %s25
      %p274 = scmp.lt.s32.totalorder %s25, 3
      %p275 = pnand %p273, %p274
      %p276 = pneg %p275
      // Predicated region
      $region9: #{tpu_custom_call.1} parent=5 // pred_check
        _
      $region10: #{tpu_custom_call.1} parent=5 // pred_check_branch
        %278 = sbr.rel (%p275) target = $region12
      $region11: #{tpu_custom_call.1} parent=5 // pred_region
        %s279 = ssub.s32 %s25, 1
        // Predicated region
        $region13: #{tpu_custom_call.1} parent=11 // pred_check
          %p280 = pneg %p46
        $region14: #{tpu_custom_call.1} parent=11 // pred_check_branch
          %282 = sbr.rel (%p280) target = $region16
        $region15: #{tpu_custom_call.1} parent=11 // pred_region
          %s284 = ssub.s32 16, 16
          %285 = vsyncadd [#allocation5], %s284
          %s287 = sshll.u32 %s0, 4
          %s288 = int_to_ptr.vmem [resolvable:$true] %s287
          %290 = dma.vmem_to_smem %s288, 16, [#allocation3], [#allocation5]
        $region16: #{tpu_custom_call.1} parent=11 // pred_fallthru
          _
        // Predicated region
        $region17: #{tpu_custom_call.1} parent=11 // pred_check
          %p291 = pneg %p67
        $region18: #{tpu_custom_call.1} parent=11 // pred_check_branch
          %293 = sbr.rel (%p291) target = $region20
        $region19: #{tpu_custom_call.1} parent=11 // pred_region
          %s295 = ssub.s32 16, 16
          %296 = vsyncadd [#allocation7], %s295
          %s298 = sshll.u32 %s1, 4
          %s299 = int_to_ptr.vmem [resolvable:$true] %s298
          %301 = dma.vmem_to_smem %s299, 16, [#allocation6], [#allocation7]
        $region20: #{tpu_custom_call.1} parent=11 // pred_fallthru
          _
        // Predicated region
        $region21: #{tpu_custom_call.1} parent=11 // pred_check
          %p302 = pneg %p88
        $region22: #{tpu_custom_call.1} parent=11 // pred_check_branch
          %304 = sbr.rel (%p302) target = $region24
        $region23: #{tpu_custom_call.1} parent=11 // pred_region
          _
        $region24: #{tpu_custom_call.1} parent=11 // pred_fallthru
          _
        // Predicated region
        $region25: #{tpu_custom_call.1} parent=11 // pred_check
          %p305 = pneg %p109
        $region26: #{tpu_custom_call.1} parent=11 // pred_check_branch
          %307 = sbr.rel (%p305) target = $region28
        $region27: #{tpu_custom_call.1} parent=11 // pred_region
          _
        $region28: #{tpu_custom_call.1} parent=11 // pred_fallthru
          _
      $region12: #{tpu_custom_call.1} parent=5 // pred_fallthru
        _
      %p308 = scmp.lt.s32.totalorder %s25, 2
      // Predicated region
      $region29: #{tpu_custom_call.1} parent=5 // pred_check
        %p309 = pneg %p308
      $region30: #{tpu_custom_call.1} parent=5 // pred_check_branch
        %311 = sbr.rel (%p309) target = $region32
      $region31: #{tpu_custom_call.1} parent=5 // pred_region
        // Predicated region
        $region33: #{tpu_custom_call.1} parent=31 // pred_check
          %p312 = pneg %p129
        $region34: #{tpu_custom_call.1} parent=31 // pred_check_branch
          %314 = sbr.rel (%p312) target = $region36
        $region35: #{tpu_custom_call.1} parent=31 // pred_region
          %s315 = smul.u32 4, %s25
          %p316 = scmp.lt.s32.totalorder %s315, 7
          %s317 = scalar_select %p316, %s315, 7
          %s318 = smul.addr %s317, 4
          %s319 = scalar_lea.vmem %s4, %s318
          %s320 = smul.u32 4, %s25
        $region36: #{tpu_custom_call.1} parent=31 // pred_fallthru
          _
        // Predicated region
        $region37: #{tpu_custom_call.1} parent=31 // pred_check
          %p321 = pneg %p155
        $region38: #{tpu_custom_call.1} parent=31 // pred_check_branch
          %323 = sbr.rel (%p321) target = $region40
        $region39: #{tpu_custom_call.1} parent=31 // pred_region
          %s324 = smul.u32 4, %s25
          %p325 = scmp.lt.s32.totalorder %s324, 7
          %s326 = scalar_select %p325, %s324, 7
          %s327 = smul.addr %s326, 4
          %s328 = scalar_lea.vmem %s5, %s327
          %s329 = smul.u32 4, %s25
        $region40: #{tpu_custom_call.1} parent=31 // pred_fallthru
          _
        // Predicated region
        $region41: #{tpu_custom_call.1} parent=31 // pred_check
          %p330 = pneg %p181
        $region42: #{tpu_custom_call.1} parent=31 // pred_check_branch
          %332 = sbr.rel (%p330) target = $region44
        $region43: #{tpu_custom_call.1} parent=31 // pred_region
          %s333 = smul.u32 4, %s25
          %p334 = scmp.lt.s32.totalorder %s333, 7
          %s335 = scalar_select %p334, %s333, 7
          %s336 = smul.addr %s335, 4
          %s337 = scalar_lea.vmem %s6, %s336
          %s338 = smul.u32 4, %s25
        $region44: #{tpu_custom_call.1} parent=31 // pred_fallthru
          _
        // Predicated region
        $region45: #{tpu_custom_call.1} parent=31 // pred_check
          %p339 = pneg %p207
        $region46: #{tpu_custom_call.1} parent=31 // pred_check_branch
          %341 = sbr.rel (%p339) target = $region48
        $region47: #{tpu_custom_call.1} parent=31 // pred_region
          %p342 = scmp.lt.s32.totalorder %s25, 1
          %s343 = scalar_select %p342, %s25, 1
          %s344 = scalar_lea.vmem %s7, %s343
        $region48: #{tpu_custom_call.1} parent=31 // pred_fallthru
          _
      $region32: #{tpu_custom_call.1} parent=5 // pred_fallthru
        _
      %p345 = scmp.le.s32.totalorder 1, %s25
      %p346 = scmp.lt.s32.totalorder %s25, 3
      %p347 = pnand %p345, %p346
      %p348 = pneg %p347
      // Predicated region
      $region49: #{tpu_custom_call.1} parent=5 // pred_check
        _
      $region50: #{tpu_custom_call.1} parent=5 // pred_check_branch
        %350 = sbr.rel (%p347) target = $region52
      $region51: #{tpu_custom_call.1} parent=5 // pred_region
        %s351 = ssub.s32 %s25, 1
        // Predicated region
        $region53: #{tpu_custom_call.1} parent=51 // pred_check
          %p352 = pneg %p46
        $region54: #{tpu_custom_call.1} parent=51 // pred_check_branch
          %354 = sbr.rel (%p352) target = $region56
        $region55: #{tpu_custom_call.1} parent=51 // pred_region
          %355 = dma.done [#allocation5], 16
        $region56: #{tpu_custom_call.1} parent=51 // pred_fallthru
          _
        // Predicated region
        $region57: #{tpu_custom_call.1} parent=51 // pred_check
          %p356 = pneg %p67
        $region58: #{tpu_custom_call.1} parent=51 // pred_check_branch
          %358 = sbr.rel (%p356) target = $region60
        $region59: #{tpu_custom_call.1} parent=51 // pred_region
          %359 = dma.done [#allocation7], 16
        $region60: #{tpu_custom_call.1} parent=51 // pred_fallthru
          _
        %360 = sfence
        %p361 = pneg %p46
        %p362 = pneg %p43
        %p363 = pneg %p67
        %p364 = pneg %p64
        %p365 = pneg %p88
        %p366 = pneg %p85
        %p367 = pneg %p109
        %p368 = pneg %p106
        %s369 = smul.u32 4, %s30
        %p370 = scmp.lt.s32.totalorder %s369, 7
        %s371 = scalar_select %p370, %s369, 7
        %s372 = smul.addr %s371, 4
        %s373 = scalar_lea.vmem %s4, %s372
        %p374 = pneg %p135
        %p375 = pneg %p132
        %s376 = smul.u32 4, %s30
        %p377 = scmp.lt.s32.totalorder %s376, 7
        %s378 = scalar_select %p377, %s376, 7
        %s379 = smul.addr %s378, 4
        %s380 = scalar_lea.vmem %s5, %s379
        %p381 = pneg %p161
        %p382 = pneg %p158
        %s383 = smul.u32 4, %s30
        %p384 = scmp.lt.s32.totalorder %s383, 7
        %s385 = scalar_select %p384, %s383, 7
        %s386 = smul.addr %s385, 4
        %s387 = scalar_lea.vmem %s6, %s386
        %p388 = pneg %p187
        %p389 = pneg %p184
        %p390 = scmp.lt.s32.totalorder %s30, 1
        %s391 = scalar_select %p390, %s30, 1
        %s392 = scalar_lea.vmem %s7, %s391
        %p393 = pneg %p213
        %p394 = pneg %p210
        %p395 = pneg %p239
        %p396 = pneg %p236
        %s397 = sand.u32 %s226, 1
        %s398 = scalar_lea.sflag [#allocation4], %s397
        %s399 = sand.u32 %s226, 1
        %s400 = scalar_lea.vmem [#allocation8], %s399
        %p401 = pneg %p265
        %p402 = pneg %p262
        %s403 = sand.u32 %s252, 1
        %s404 = scalar_lea.sflag [#allocation10], %s403
        %s405 = sand.u32 %s252, 1
        %s406 = scalar_lea.vmem [#allocation9], %s405
        %s407 = smul.u32 4, %s30
        %p408 = scmp.lt.s32.totalorder %s407, 7
        %s409 = scalar_select %p408, %s407, 7
        %s410 = smul.addr %s409, 4
        %s411 = scalar_lea.vmem %s4, %s410
        %s412 = smul.u32 4, %s30
        %s413 = smul.u32 4, %s30
        %p414 = scmp.lt.s32.totalorder %s413, 7
        %s415 = scalar_select %p414, %s413, 7
        %s416 = smul.addr %s415, 4
        %s417 = scalar_lea.vmem %s5, %s416
        %s418 = smul.u32 4, %s30
        %s419 = smul.u32 4, %s30
        %p420 = scmp.lt.s32.totalorder %s419, 7
        %s421 = scalar_select %p420, %s419, 7
        %s422 = smul.addr %s421, 4
        %s423 = scalar_lea.vmem %s6, %s422
        %s424 = smul.u32 4, %s30
        %p425 = scmp.lt.s32.totalorder %s30, 1
        %s426 = scalar_select %p425, %s30, 1
        %s427 = scalar_lea.vmem %s7, %s426
        %v428 = vld [vmem:[%s411] sm:$0xf]
        %v429 = vld [vmem:[%s411 + $0x4] sm:$0xf]
        %v430 = vld [vmem:[%s411 + $0x8] sm:$0xf]
        %v431 = vld [vmem:[%s411 + $0xc] sm:$0xf]
        %v432 = vunpack.c.l.bf16 %v428
        %v433 = vunpack.c.l.bf16 %v429
        %v434 = vunpack.c.l.bf16 %v430
        %v435 = vunpack.c.l.bf16 %v431
        %v436 = vld [vmem:[%s417] sm:$0xf]
        %v437 = vld [vmem:[%s417 + $0x4] sm:$0xf]
        %v438 = vld [vmem:[%s417 + $0x8] sm:$0xf]
        %v439 = vld [vmem:[%s417 + $0xc] sm:$0xf]
        %v440 = vunpack.c.l.bf16 %v436
        %v441 = vunpack.c.l.bf16 %v437
        %v442 = vunpack.c.l.bf16 %v438
        %v443 = vunpack.c.l.bf16 %v439
        %v444 = vld [vmem:[%s423] sm:$0xf]
        %v445 = vld [vmem:[%s423 + $0x4] sm:$0xf]
        %v446 = vld [vmem:[%s423 + $0x8] sm:$0xf]
        %v447 = vld [vmem:[%s423 + $0xc] sm:$0xf]
        %v448 = vunpack.c.l.bf16 %v444
        %v449 = vunpack.c.l.bf16 %v445
        %v450 = vunpack.c.l.bf16 %v446
        %v451 = vunpack.c.l.bf16 %v447
        %v452 = vld [vmem:[%s3] sm:$0xf]
        %s453 = sld [smem:[#allocation6]]
        %v454 = vstv %s453
        %v455 = vadd.f32 %v454, 0.0
        %s456 = sld [smem:[#allocation3]]
        %v457 = vstv %s456
        %v458 = vmul.f32 %v457, %v432
        %v459 = vmul.f32 %v457, %v433
        %v460 = vmul.f32 %v457, %v434
        %v461 = vmul.f32 %v457, %v435
        %v462 = vadd.f32 %v455, %v458
        %v463 = vadd.f32 %v455, %v459
        %v464 = vadd.f32 %v455, %v460
        %v465 = vadd.f32 %v455, %v461
        %s466 = sld [smem:[#allocation3 + $0x1]]
        %v467 = vstv %s466
        %v468 = vmul.f32 %v467, %v440
        %v469 = vmul.f32 %v467, %v441
        %v470 = vmul.f32 %v467, %v442
        %v471 = vmul.f32 %v467, %v443
        %v472 = vadd.f32 %v462, %v468
        %v473 = vadd.f32 %v463, %v469
        %v474 = vadd.f32 %v464, %v470
        %v475 = vadd.f32 %v465, %v471
        %s476 = sld [smem:[#allocation3 + $0x2]]
        %v477 = vstv %s476
        %v478 = vmul.f32 %v477, %v448
        %v479 = vmul.f32 %v477, %v449
        %v480 = vmul.f32 %v477, %v450
        %v481 = vmul.f32 %v477, %v451
        %v482 = vadd.f32 %v472, %v478
        %v483 = vadd.f32 %v473, %v479
        %v484 = vadd.f32 %v474, %v480
        %v485 = vadd.f32 %v475, %v481
        %v486 = vtanh.pop %v482
        %v487 = vtanh.pop %v483
        %v488 = vtanh.pop %v484
        %v489 = vtanh.pop %v485
        %v490 = vlaneseq
        %v491 = vshrl.u32 %v490, 7
        %v492 = vsub.s32 0, %v491
        %v493 = vrot.slane %v452, %v492
        %v494 = vmul.f32 %v486, %v493
        %v495 = vmul.f32 %v487, %v493
        %v496 = vmul.f32 %v488, %v493
        %v497 = vmul.f32 %v489, %v493
        %v498 = vadd.f32 %v494, 0.0
        %v499 = vadd.f32 %v495, 0.0
        %v500 = vadd.f32 %v496, 0.0
        %v501 = vadd.f32 %v497, 0.0
        %s502 = sld [smem:[#allocation6 + $0x1]]
        %v503 = vstv %s502
        %v504 = vadd.f32 %v503, 0.0
        %s505 = sld [smem:[#allocation3 + $0x3]]
        %v506 = vstv %s505
        %v507 = vmul.f32 %v506, %v432
        %v508 = vmul.f32 %v506, %v433
        %v509 = vmul.f32 %v506, %v434
        %v510 = vmul.f32 %v506, %v435
        %v511 = vadd.f32 %v504, %v507
        %v512 = vadd.f32 %v504, %v508
        %v513 = vadd.f32 %v504, %v509
        %v514 = vadd.f32 %v504, %v510
        %s515 = sld [smem:[#allocation3 + $0x4]]
        %v516 = vstv %s515
        %v517 = vmul.f32 %v516, %v440
        %v518 = vmul.f32 %v516, %v441
        %v519 = vmul.f32 %v516, %v442
        %v520 = vmul.f32 %v516, %v443
        %v521 = vadd.f32 %v511, %v517
        %v522 = vadd.f32 %v512, %v518
        %v523 = vadd.f32 %v513, %v519
        %v524 = vadd.f32 %v514, %v520
        %s525 = sld [smem:[#allocation3 + $0x5]]
        %v526 = vstv %s525
        %v527 = vmul.f32 %v526, %v448
        %v528 = vmul.f32 %v526, %v449
        %v529 = vmul.f32 %v526, %v450
        %v530 = vmul.f32 %v526, %v451
        %v531 = vadd.f32 %v521, %v527
        %v532 = vadd.f32 %v522, %v528
        %v533 = vadd.f32 %v523, %v529
        %v534 = vadd.f32 %v524, %v530
        %v535 = vtanh.pop %v531
        %v536 = vtanh.pop %v532
        %v537 = vtanh.pop %v533
        %v538 = vtanh.pop %v534
        %v539 = vlaneseq
        %v540 = vshrl.u32 %v539, 7
        %v541 = vsub.s32 1, %v540
        %v542 = vrot.slane %v452, %v541
        %v543 = vmul.f32 %v535, %v542
        %v544 = vmul.f32 %v536, %v542
        %v545 = vmul.f32 %v537, %v542
        %v546 = vmul.f32 %v538, %v542
        %v547 = vadd.f32 %v498, %v543
        %v548 = vadd.f32 %v499, %v544
        %v549 = vadd.f32 %v500, %v545
        %v550 = vadd.f32 %v501, %v546
        %s551 = sld [smem:[#allocation6 + $0x2]]
        %v552 = vstv %s551
        %v553 = vadd.f32 %v552, 0.0
        %s554 = sld [smem:[#allocation3 + $0x6]]
        %v555 = vstv %s554
        %v556 = vmul.f32 %v555, %v432
        %v557 = vmul.f32 %v555, %v433
        %v558 = vmul.f32 %v555, %v434
        %v559 = vmul.f32 %v555, %v435
        %v560 = vadd.f32 %v553, %v556
        %v561 = vadd.f32 %v553, %v557
        %v562 = vadd.f32 %v553, %v558
        %v563 = vadd.f32 %v553, %v559
        %s564 = sld [smem:[#allocation3 + $0x7]]
        %v565 = vstv %s564
        %v566 = vmul.f32 %v565, %v440
        %v567 = vmul.f32 %v565, %v441
        %v568 = vmul.f32 %v565, %v442
        %v569 = vmul.f32 %v565, %v443
        %v570 = vadd.f32 %v560, %v566
        %v571 = vadd.f32 %v561, %v567
        %v572 = vadd.f32 %v562, %v568
        %v573 = vadd.f32 %v563, %v569
        %s574 = sld [smem:[#allocation3 + $0x8]]
        %v575 = vstv %s574
        %v576 = vmul.f32 %v575, %v448
        %v577 = vmul.f32 %v575, %v449
        %v578 = vmul.f32 %v575, %v450
        %v579 = vmul.f32 %v575, %v451
        %v580 = vadd.f32 %v570, %v576
        %v581 = vadd.f32 %v571, %v577
        %v582 = vadd.f32 %v572, %v578
        %v583 = vadd.f32 %v573, %v579
        %v584 = vtanh.pop %v580
        %v585 = vtanh.pop %v581
        %v586 = vtanh.pop %v582
        %v587 = vtanh.pop %v583
        %v588 = vlaneseq
        %v589 = vshrl.u32 %v588, 7
        %v590 = vsub.s32 2, %v589
        %v591 = vrot.slane %v452, %v590
        %v592 = vmul.f32 %v584, %v591
        %v593 = vmul.f32 %v585, %v591
        %v594 = vmul.f32 %v586, %v591
        %v595 = vmul.f32 %v587, %v591
        %v596 = vadd.f32 %v547, %v592
        %v597 = vadd.f32 %v548, %v593
        %v598 = vadd.f32 %v549, %v594
        %v599 = vadd.f32 %v550, %v595
        %s600 = sld [smem:[#allocation6 + $0x3]]
        %v601 = vstv %s600
        %v602 = vadd.f32 %v601, 0.0
        %s603 = sld [smem:[#allocation3 + $0x9]]
        %v604 = vstv %s603
        %v605 = vmul.f32 %v604, %v432
        %v606 = vmul.f32 %v604, %v433
        %v607 = vmul.f32 %v604, %v434
        %v608 = vmul.f32 %v604, %v435
        %v609 = vadd.f32 %v602, %v605
        %v610 = vadd.f32 %v602, %v606
        %v611 = vadd.f32 %v602, %v607
        %v612 = vadd.f32 %v602, %v608
        %s613 = sld [smem:[#allocation3 + $0xa]]
        %v614 = vstv %s613
        %v615 = vmul.f32 %v614, %v440
        %v616 = vmul.f32 %v614, %v441
        %v617 = vmul.f32 %v614, %v442
        %v618 = vmul.f32 %v614, %v443
        %v619 = vadd.f32 %v609, %v615
        %v620 = vadd.f32 %v610, %v616
        %v621 = vadd.f32 %v611, %v617
        %v622 = vadd.f32 %v612, %v618
        %s623 = sld [smem:[#allocation3 + $0xb]]
        %v624 = vstv %s623
        %v625 = vmul.f32 %v624, %v448
        %v626 = vmul.f32 %v624, %v449
        %v627 = vmul.f32 %v624, %v450
        %v628 = vmul.f32 %v624, %v451
        %v629 = vadd.f32 %v619, %v625
        %v630 = vadd.f32 %v620, %v626
        %v631 = vadd.f32 %v621, %v627
        %v632 = vadd.f32 %v622, %v628
        %v633 = vtanh.pop %v629
        %v634 = vtanh.pop %v630
        %v635 = vtanh.pop %v631
        %v636 = vtanh.pop %v632
        %v637 = vlaneseq
        %v638 = vshrl.u32 %v637, 7
        %v639 = vsub.s32 3, %v638
        %v640 = vrot.slane %v452, %v639
        %v641 = vmul.f32 %v633, %v640
        %v642 = vmul.f32 %v634, %v640
        %v643 = vmul.f32 %v635, %v640
        %v644 = vmul.f32 %v636, %v640
        %v645 = vadd.f32 %v596, %v641
        %v646 = vadd.f32 %v597, %v642
        %v647 = vadd.f32 %v598, %v643
        %v648 = vadd.f32 %v599, %v644
        %649 = vxpose.xlu0.b32.start [1/16] %v645, 128
        %650 = vxpose.xlu0.b32.cont [2/16] %v646, 128
        %651 = vxpose.xlu0.b32.cont [3/16] %v647, 128
        %652 = vxpose.xlu0.b32.cont [4/16] %v648, 128
        %653 = vxpose.xlu0.b32.cont [5/16] 0.0, 128
        %654 = vxpose.xlu0.b32.cont [6/16] 0.0, 128
        %655 = vxpose.xlu0.b32.cont [7/16] 0.0, 128
        %656 = vxpose.xlu0.b32.cont [8/16] 0.0, 128
        %657 = vxpose.xlu0.b32.cont [9/16] 0.0, 128
        %658 = vxpose.xlu0.b32.cont [10/16] 0.0, 128
        %659 = vxpose.xlu0.b32.cont [11/16] 0.0, 128
        %660 = vxpose.xlu0.b32.cont [12/16] 0.0, 128
        %661 = vxpose.xlu0.b32.cont [13/16] 0.0, 128
        %662 = vxpose.xlu0.b32.cont [14/16] 0.0, 128
        %663 = vxpose.xlu0.b32.cont [15/16] 0.0, 128
        %664 = vxpose.xlu0.b32.end [16/16] 0.0, 128
        %v665 = vpop.trf.xlu0
        %v666 = vpop.trf.xlu0
        %v667 = vpop.trf.xlu0
        %v668 = vpop.trf.xlu0
        %v669 = vpop.trf.xlu0
        %v670 = vpop.trf.xlu0
        %v671 = vpop.trf.xlu0
        %v672 = vpop.trf.xlu0
        %v673 = vpop.trf.xlu0
        %v674 = vpop.trf.xlu0
        %v675 = vpop.trf.xlu0
        %v676 = vpop.trf.xlu0
        %v677 = vpop.trf.xlu0
        %v678 = vpop.trf.xlu0
        %v679 = vpop.trf.xlu0
        %v680 = vpop.trf.xlu0
        %vm681 = vcmask 261120
        %v682 = vsel %vm681, %v665, 0.0
        %v683 = vsel %vm681, %v666, 0.0
        %v684 = vadd.f32 %v682, %v683
        %v685 = vsel %vm681, %v667, 0.0
        %v686 = vadd.f32 %v684, %v685
        %v687 = vsel %vm681, %v668, 0.0
        %v688 = vadd.f32 %v686, %v687
        %v689 = vrot.slane %v688, 4
        %v690 = vadd.f32 %v688, %v689
        %v691 = vrot.slane %v690, 2
        %v692 = vadd.f32 %v690, %v691
        %v693 = vrot.slane %v692, 1
        %v694 = vadd.f32 %v692, %v693
        %s695 = sld [smem:[#allocation2]]
        %v696 = vstv %s695
        %v697 = vadd.f32 %v694, %v696
        %vm698 = vcmask 253952
        %699 = vst.msk [vmem:[%s400] sm:$0x1] %vm698, %v697
        %v700 = vld [vmem:[%s427] sm:$0x1]
        %v701 = vmul.f32 %v697, %v700
        %v702 = vmax.f32 %v701, 0.0
        %v703 = vand.u32 2147483647, %v701
        %v704 = vsub.f32 0.0, %v703
        %v705 = vmul.f32 %v704, 1.442695
        %v706 = vpow.pop %v705
        %v707 = vadd.f32 %v706, 1.0
        %v708 = vlog2.pop %v707
        %v709 = vmul.f32 %v708, 0.6931472
        %v710 = vmul.f32 -0.5, %v706
        %v711 = vadd.f32 %v710, 1.0
        %v712 = vmul.f32 %v711, %v706
        %v713 = vand.u32 2147483647, %v706
        %vm714 = vcmp.lt.f32.partialorder %v713, 0.0004427343
        %v715 = vsel %vm714, %v712, %v709
        %v716 = vadd.f32 %v702, %v715
        %717 = vst.msk [vmem:[%s406] sm:$0x1] %vm698, %v716
        %s718 = sand.u32 %s226, 1
        %s719 = scalar_lea.sflag [#allocation4], %s718
        %s720 = sand.u32 %s226, 1
        %s721 = scalar_lea.vmem [#allocation8], %s720
        %s722 = sand.u32 %s252, 1
        %s723 = scalar_lea.sflag [#allocation10], %s722
        %s724 = sand.u32 %s252, 1
        %s725 = scalar_lea.vmem [#allocation9], %s724
        // Predicated region
        $region61: #{tpu_custom_call.1} parent=51 // pred_check
          %p726 = pneg %p236
        $region62: #{tpu_custom_call.1} parent=51 // pred_check_branch
          %728 = sbr.rel (%p726) target = $region64
        $region63: #{tpu_custom_call.1} parent=51 // pred_region
          %s730 = ssub.s32 16, 16
          %731 = vsyncadd %s719, %s730
          %s732 = smul.addr %s30, 16
          %s733 = scalar_lea.hbm %s8, %s732
          %s735 = sshll.u32 %s721, 4
          %s736 = int_to_ptr.vmem [resolvable:$true] %s735
          %738 = dma.vmem_to_hbm [thread:$0]  %s736, 16, %s733, %s719
        $region64: #{tpu_custom_call.1} parent=51 // pred_fallthru
          _
        // Predicated region
        $region65: #{tpu_custom_call.1} parent=51 // pred_check
          %p739 = pneg %p262
        $region66: #{tpu_custom_call.1} parent=51 // pred_check_branch
          %741 = sbr.rel (%p739) target = $region68
        $region67: #{tpu_custom_call.1} parent=51 // pred_region
          %s743 = ssub.s32 16, 16
          %744 = vsyncadd %s723, %s743
          %s745 = smul.addr %s30, 16
          %s746 = scalar_lea.hbm %s9, %s745
          %s748 = sshll.u32 %s725, 4
          %s749 = int_to_ptr.vmem [resolvable:$true] %s748
          %751 = dma.vmem_to_hbm [thread:$0]  %s749, 16, %s746, %s723
        $region68: #{tpu_custom_call.1} parent=51 // pred_fallthru
          _
      $region52: #{tpu_custom_call.1} parent=5 // pred_fallthru
        _
      %p752 = scmp.le.s32.totalorder 2, %s25
      // Predicated region
      $region69: #{tpu_custom_call.1} parent=5 // pred_check
        %p753 = pneg %p752
      $region70: #{tpu_custom_call.1} parent=5 // pred_check_branch
        %755 = sbr.rel (%p753) target = $region72
      $region71: #{tpu_custom_call.1} parent=5 // pred_region
        %s756 = ssub.s32 %s25, 2
        // Predicated region
        $region73: #{tpu_custom_call.1} parent=71 // pred_check
          %p757 = pneg %p242
        $region74: #{tpu_custom_call.1} parent=71 // pred_check_branch
          %759 = sbr.rel (%p757) target = $region76
        $region75: #{tpu_custom_call.1} parent=71 // pred_region
          %s760 = sand.u32 %s227, 1
          %s761 = scalar_lea.sflag [#allocation4], %s760
          %s762 = sand.u32 %s227, 1
          %s763 = scalar_lea.vmem [#allocation8], %s762
          %764 = dma.done %s761, 16
        $region76: #{tpu_custom_call.1} parent=71 // pred_fallthru
          _
        // Predicated region
        $region77: #{tpu_custom_call.1} parent=71 // pred_check
          %p765 = pneg %p268
        $region78: #{tpu_custom_call.1} parent=71 // pred_check_branch
          %767 = sbr.rel (%p765) target = $region80
        $region79: #{tpu_custom_call.1} parent=71 // pred_region
          %s768 = sand.u32 %s253, 1
          %s769 = scalar_lea.sflag [#allocation10], %s768
          %s770 = sand.u32 %s253, 1
          %s771 = scalar_lea.vmem [#allocation9], %s770
          %772 = dma.done %s769, 16
        $region80: #{tpu_custom_call.1} parent=71 // pred_fallthru
          _
      $region72: #{tpu_custom_call.1} parent=5 // pred_fallthru
        _
    $region6: #{tpu_custom_call.1} parent=1 // loop_footer
      %s29 = sadd.s32 1, %s25
    $region7: #{tpu_custom_call.1} parent=1 // loop_footer_branch
      %24 = sbr.rel target = $region3
    $region8: #{tpu_custom_call.1} parent=1 // loop_exit
      _
    %773 = vsyncpa [#allocation4], 1
    %s774 = scalar_lea.sflag [#allocation4], 1
    %775 = vsyncpa %s774, 1
    %776 = vsyncpa [#allocation10], 1
    %s777 = scalar_lea.sflag [#allocation10], 1
    %778 = vsyncpa %s777, 1
    %779 = vsyncpa [#allocation5], 1
    %s780 = scalar_lea.sflag [#allocation5], 1
    %781 = vsyncpa %s780, 1
    %782 = vsyncpa [#allocation7], 1

</llo_original>
